<compile_context>
chip_gen: v5e
topology: v5e:2x2
jax: 0.10.0
libtpu: 0.0.40
codegen_flags: <defaults>
</compile_context>

<pallas_src>
import functools
import math

import jax
import jax.numpy as jnp
from jax.experimental import pallas as pl
from jax.experimental.pallas import tpu as pltpu


def _label_smoothing_kernel(x_ref, tgt_ref, out_ref, acc_ref, *,
                            n_rows, tile_rows, size, padding_idx, smoothing):
    """x_ref: (TB, V) log-probs; tgt_ref: (TB, 1) int32; out: (1, 1); acc: (8, V)."""
    pid = pl.program_id(0)

    @pl.when(pid == 0)
    def _init():
        acc_ref[...] = jnp.zeros_like(acc_ref)

    x = x_ref[...].astype(jnp.float32)              # (TB, V), in-kernel f32 upcast
    tgt = tgt_ref[...]                              # (TB, 1) int32
    tb, v = x.shape

    confidence = 1.0 - smoothing
    fill = smoothing / (size - 2)
    # td only takes 3 values -> log(td) is a compile-time constant per branch.
    log_conf = math.log(confidence) if confidence > 0.0 else 0.0
    log_fill = math.log(fill) if fill > 0.0 else 0.0

    col = jax.lax.broadcasted_iota(jnp.int32, (tb, v), 1)           # absolute (V whole)
    rows = pid * tile_rows + jax.lax.broadcasted_iota(jnp.int32, (tb, 1), 0)

    is_tgt = col == tgt                                             # scatter as compare
    # Fused zero mask: padding column | padding-target row | out-of-range (tail) row.
    zero = (col == padding_idx) | (tgt == padding_idx) | (rows >= n_rows)
    if fill <= 0.0:          # smoothing == 0: only the target column is live
        zero = zero | jnp.logical_not(is_tgt)
    if confidence <= 0.0:    # degenerate smoothing == 1 edge case
        zero = zero | is_tgt

    td = jnp.where(is_tgt, confidence, fill)
    log_td = jnp.where(is_tgt, log_conf, log_fill)
    contrib = jnp.where(zero, 0.0, td * (log_td - x))               # (TB, V)

    # Fold sublane groups with pure VPU adds (sublane-aligned static slices);
    # the cross-lane reduce is deferred to the single finalize step.
    groups = tb // 8
    folded = contrib[0:8, :]
    for r in range(1, groups):
        folded = folded + contrib[r * 8:(r + 1) * 8, :]
    acc_ref[...] += folded

    @pl.when(pid == pl.num_programs(0) - 1)
    def _finalize():
        out_ref[...] = jnp.sum(acc_ref[...], keepdims=True)         # (1, 1)


def _pick_tile_rows(n, v, itemsize, budget_bytes=8 * 1024 * 1024, max_rows=512):
    """Rows per tile: ~8 MiB per buffer (double-buffered -> ~16 MiB of x in VMEM),
    always a multiple of 8, capped to keep the in-kernel fold unroll small."""
    n_pad = ((n + 7) // 8) * 8
    rows = (budget_bytes // max(1, v * itemsize)) // 8 * 8
    return int(max(8, min(rows, max_rows, n_pad)))


def label_smoothing_loss(x, target, *, size, padding_idx, smoothing=0.0,
                         tile_rows=None):
    """JAX/Pallas equivalent of LabelSmoothing.forward (returns scalar f32 loss)."""
    n, v = x.shape
    assert v == size
    assert target.shape == (n,)
    tgt2d = target.astype(jnp.int32).reshape(n, 1)

    itemsize = jnp.dtype(x.dtype).itemsize
    tb = int(tile_rows) if tile_rows is not None else _pick_tile_rows(n, v, itemsize)
    assert tb % 8 == 0, "tile_rows must be a multiple of 8"
    num_tiles = (n + tb - 1) // tb

    kernel = functools.partial(
        _label_smoothing_kernel,
        n_rows=int(n), tile_rows=tb, size=int(size),
        padding_idx=int(padding_idx), smoothing=float(smoothing))

    cost = pl.CostEstimate(
        flops=8 * n * v,
        transcendentals=0,
        bytes_accessed=n * v * itemsize + n * 4 + 4)

    out = pl.pallas_call(
        kernel,
        out_shape=jax.ShapeDtypeStruct((1, 1), jnp.float32),
        grid_spec=pltpu.PrefetchScalarGridSpec(
            num_scalar_prefetch=0,
            grid=(num_tiles,),
            in_specs=[
                pl.BlockSpec((tb, v), lambda i: (i, 0)),   # log-probs tile
                pl.BlockSpec((tb, 1), lambda i: (i, 0)),   # targets tile
            ],
            out_specs=pl.BlockSpec((1, 1), lambda i: (0, 0)),
            scratch_shapes=[pltpu.VMEM((8, v), jnp.float32)],  # deferred-reduce acc
        ),
        compiler_params=pltpu.CompilerParams(
            dimension_semantics=("arbitrary",),            # reduction axis
            vmem_limit_bytes=32 * 1024 * 1024),
        cost_estimate=cost,
    )(x, tgt2d)
    return out[0, 0]


# ---------------- pure-JAX reference (for verification only) ----------------
def _label_smoothing_ref(x, target, *, size, padding_idx, smoothing):
    confidence = 1.0 - smoothing
    fill = smoothing / (size - 2)
    n, v = x.shape
    td = jnp.full((n, v), fill, jnp.float32)
    td = td.at[jnp.arange(n), target].set(confidence)
    td = td.at[:, padding_idx].set(0.0)
    td = jnp.where((target == padding_idx)[:, None], 0.0, td)
    safe = jnp.where(td > 0.0, td, 1.0)
    return jnp.sum(jnp.where(td > 0.0, td * (jnp.log(safe) - x.astype(jnp.float32)), 0.0))


if __name__ == "__main__":
    key = jax.random.PRNGKey(0)

    # --- test 1: module-consistent small shape (single tile) ---
    k1, k2, k3, k4 = jax.random.split(key, 4)
    N, V = 8, 16
    padding_idx, smoothing = 0, 0.1
    logits = jax.random.normal(k1, (N, V), dtype=jnp.float32)
    x = jax.nn.log_softmax(logits, axis=-1)          # KLDivLoss expects log-probs
    target = jax.random.randint(k2, (N,), 0, V, dtype=jnp.int32)
    target = target.at[1].set(padding_idx)           # exercise padding-row path

    loss = jax.block_until_ready(
        label_smoothing_loss(x, target, size=V, padding_idx=padding_idx,
                             smoothing=smoothing))
    ref = jax.block_until_ready(
        _label_smoothing_ref(x, target, size=V, padding_idx=padding_idx,
                             smoothing=smoothing))
    assert jnp.allclose(loss, ref, rtol=1e-5, atol=1e-6), (loss, ref)

    # --- test 2: multi-tile streaming path (grid of 3, forced TB=8) ---
    N2, V2 = 24, 128
    logits2 = jax.random.normal(k3, (N2, V2), dtype=jnp.float32)
    x2 = jax.nn.log_softmax(logits2, axis=-1)
    target2 = jax.random.randint(k4, (N2,), 0, V2, dtype=jnp.int32)
    target2 = target2.at[5].set(padding_idx)

    loss2 = jax.block_until_ready(
        label_smoothing_loss(x2, target2, size=V2, padding_idx=padding_idx,
                             smoothing=smoothing, tile_rows=8))
    ref2 = jax.block_until_ready(
        _label_smoothing_ref(x2, target2, size=V2, padding_idx=padding_idx,
                             smoothing=smoothing))
    assert jnp.allclose(loss2, ref2, rtol=1e-5, atol=1e-5), (loss2, ref2)

    print("KERNEL_OK")
</pallas_src>

<mosaic_0001>
module attributes {stable_mosaic.version = 11 : i64} {
  func.func @_label_smoothing_kernel(%arg0: i32, %arg1: memref<8x16xf32, #tpu.memory_space<vmem>>, %arg2: memref<8x1xi32, #tpu.memory_space<vmem>>, %arg3: memref<1x1xf32, #tpu.memory_space<vmem>>, %arg4: memref<8x16xf32, #tpu.memory_space<vmem>>) attributes {dimension_semantics = [#tpu.dimension_semantics<arbitrary>], iteration_bounds = array<i64: 1>, scalar_prefetch = 0 : i64, scratch_operands = 1 : i64, tpu.core_type = #tpu.core_type<tc>, window_params = [{transform_indices = @transform_0, window_bounds = array<i64: 8, 16>}, {transform_indices = @transform_1, window_bounds = array<i64: 8, 1>}, {pipeline_mode = #tpu.pipeline_mode<synchronous>, transform_indices = @transform_2, window_bounds = array<i64: 1, 1>}]} {
    %c0_i32 = arith.constant 0 : i32
    %0 = arith.cmpi eq, %arg0, %c0_i32 : i32
    %1 = arith.extui %0 : i1 to i32
    %c0_i32_0 = arith.constant 0 : i32
    %2 = arith.cmpi ne, %1, %c0_i32_0 : i32
    scf.if %2 {
      %cst_17 = arith.constant 0.000000e+00 : f32
      %38 = vector.broadcast %cst_17 : f32 to vector<8x16xf32>
      %c0_18 = arith.constant 0 : index
      %c0_19 = arith.constant 0 : index
      %39 = vector.load %arg4[%c0_18, %c0_19] : memref<8x16xf32, #tpu.memory_space<vmem>>, vector<8x16xf32>
      tpu.vector_store %arg4[%c0_18, %c0_19], %38 {strides = array<i32>} : memref<8x16xf32, #tpu.memory_space<vmem>>, vector<8x16xf32>,
    } else {
    }
    %c0 = arith.constant 0 : index
    %c0_1 = arith.constant 0 : index
    %3 = vector.load %arg1[%c0, %c0_1] : memref<8x16xf32, #tpu.memory_space<vmem>>, vector<8x16xf32>
    %c0_2 = arith.constant 0 : index
    %c0_3 = arith.constant 0 : index
    %4 = vector.load %arg2[%c0_2, %c0_3] : memref<8x1xi32, #tpu.memory_space<vmem>>, vector<8x1xi32>
    %5 = tpu.iota {dimensions = array<i32: 1>} : vector<8x16xi32>
    %c8_i32 = arith.constant 8 : i32
    %6 = arith.muli %arg0, %c8_i32 : i32
    %7 = tpu.iota {dimensions = array<i32: 0>} : vector<8x1xi32>
    %8 = vector.broadcast %6 : i32 to vector<8x1xi32>
    %9 = arith.addi %8, %7 : vector<8x1xi32>
    %10 = vector.broadcast %4 : vector<8x1xi32> to vector<8x16xi32>
    %11 = arith.cmpi eq, %5, %10 : vector<8x16xi32>
    %c0_i32_4 = arith.constant 0 : i32
    %12 = vector.broadcast %c0_i32_4 : i32 to vector<8x16xi32>
    %13 = arith.cmpi eq, %5, %12 : vector<8x16xi32>
    %c0_i32_5 = arith.constant 0 : i32
    %14 = vector.broadcast %c0_i32_5 : i32 to vector<8x1xi32>
    %15 = arith.cmpi eq, %4, %14 : vector<8x1xi32>
    %16 = vector.broadcast %15 : vector<8x1xi1> to vector<8x16xi1>
    %17 = arith.ori %13, %16 : vector<8x16xi1>
    %c8_i32_6 = arith.constant 8 : i32
    %18 = vector.broadcast %c8_i32_6 : i32 to vector<8x1xi32>
    %19 = arith.cmpi sge, %9, %18 : vector<8x1xi32>
    %20 = vector.broadcast %19 : vector<8x1xi1> to vector<8x16xi1>
    %21 = arith.ori %17, %20 : vector<8x16xi1>
    %cst = arith.constant 0.899999976 : f32
    %cst_7 = arith.constant 0.00714285718 : f32
    %22 = vector.broadcast %cst : f32 to vector<8x16xf32>
    %23 = vector.broadcast %cst_7 : f32 to vector<8x16xf32>
    %24 = arith.select %11, %22, %23 : vector<8x16xi1>, vector<8x16xf32>
    %cst_8 = arith.constant -0.105360515 : f32
    %cst_9 = arith.constant -4.94164228 : f32
    %25 = vector.broadcast %cst_8 : f32 to vector<8x16xf32>
    %26 = vector.broadcast %cst_9 : f32 to vector<8x16xf32>
    %27 = arith.select %11, %25, %26 : vector<8x16xi1>, vector<8x16xf32>
    %28 = arith.subf %27, %3 : vector<8x16xf32>
    %29 = arith.mulf %24, %28 : vector<8x16xf32>
    %cst_10 = arith.constant 0.000000e+00 : f32
    %30 = vector.broadcast %cst_10 : f32 to vector<8x16xf32>
    %31 = arith.select %21, %30, %29 : vector<8x16xi1>, vector<8x16xf32>
    %c0_11 = arith.constant 0 : index
    %c0_12 = arith.constant 0 : index
    %32 = vector.load %arg4[%c0_11, %c0_12] : memref<8x16xf32, #tpu.memory_space<vmem>>, vector<8x16xf32>
    %33 = arith.addf %32, %31 : vector<8x16xf32>
    %c0_13 = arith.constant 0 : index
    %c0_14 = arith.constant 0 : index
    %34 = vector.load %arg4[%c0_13, %c0_14] : memref<8x16xf32, #tpu.memory_space<vmem>>, vector<8x16xf32>
    tpu.vector_store %arg4[%c0_13, %c0_14], %33 {strides = array<i32>} : memref<8x16xf32, #tpu.memory_space<vmem>>, vector<8x16xf32>,
    %c0_i32_15 = arith.constant 0 : i32
    %35 = arith.cmpi eq, %arg0, %c0_i32_15 : i32
    %36 = arith.extui %35 : i1 to i32
    %c0_i32_16 = arith.constant 0 : i32
    %37 = arith.cmpi ne, %36, %c0_i32_16 : i32
    scf.if %37 {
      %c0_17 = arith.constant 0 : index
      %c0_18 = arith.constant 0 : index
      %38 = vector.load %arg4[%c0_17, %c0_18] : memref<8x16xf32, #tpu.memory_space<vmem>>, vector<8x16xf32>
      %39 = vector.shape_cast %38 : vector<8x16xf32> to vector<1x8x16xf32>
      %cst_19 = arith.constant dense<0.000000e+00> : vector<1xf32>
      %40 = vector.multi_reduction <add>, %39, %cst_19 [1, 2] : vector<1x8x16xf32> to vector<1xf32>
      %41 = vector.shape_cast %40 : vector<1xf32> to vector<1x1x1xf32>
      %42 = vector.extract %41[0, 0, 0] : f32 from vector<1x1x1xf32>
      %43 = vector.broadcast %42 : f32 to vector<1x1xf32>
      %c0_20 = arith.constant 0 : index
      %c0_21 = arith.constant 0 : index
      %44 = vector.load %arg3[%c0_20, %c0_21] : memref<1x1xf32, #tpu.memory_space<vmem>>, vector<1x1xf32>
      tpu.vector_store %arg3[%c0_20, %c0_21], %43 {strides = array<i32>} : memref<1x1xf32, #tpu.memory_space<vmem>>, vector<1x1xf32>,
    } else {
    }
    return
  }
  func.func @transform_0(%arg0: i32) -> (i32, i32) {
    %c0_i32 = arith.constant 0 : i32
    %c0_i32_0 = arith.constant 0 : i32
    return %arg0, %c0_i32 : i32, i32
  }
  func.func @transform_1(%arg0: i32) -> (i32, i32) {
    %c0_i32 = arith.constant 0 : i32
    %c0_i32_0 = arith.constant 0 : i32
    return %arg0, %c0_i32 : i32, i32
  }
  func.func @transform_2(%arg0: i32) -> (i32, i32) {
    %c0_i32 = arith.constant 0 : i32
    %c0_i32_0 = arith.constant 0 : i32
    %c0_i32_1 = arith.constant 0 : i32
    return %c0_i32, %c0_i32_0 : i32, i32
  }
}

</mosaic_0001>

<llo_original>
// kernel: tpu_custom_call.1
$region0: #{tpu_custom_call.1}
  #allocation0 [shape = 'u32[]', space=smem, size = 0x4, offset = 0x4, fixed_abs, tag = 'smem constant byte address 0x4 - core index']
  #allocation1 [shape = 'u32[72,128]{1,0:T(1,128)}', space=vmem, size = 0x9000, scoped, tag = 'internal scratch']
  #allocation2 [shape = 'f32[8,16]{1,0:T(8,128)}', space=vmem, size = 0x1000, scoped, tag = 'scratch operand']
  %s0 = inlined_call_operand.vmem [shape: f32[8,16], index: 0, kind: input, shape index: {}]
  %s1 = inlined_call_operand.vmem [shape: s32[8,1], index: 1, kind: input, shape index: {}]
  %s2 = inlined_call_operand.hbm [shape: f32[1,1], index: 2, kind: output, shape index: {}]
  %s3 = sld [smem:[#allocation0]]
  $region26: #{tpu_custom_call.1} parent=0
    _
  %s5 = ssub.s32 1, %s3
  %s6 = scalar_select 0, %s5, %s3
  $region1: #{tpu_custom_call.1} parent=0
    #allocation3 [shape = 'u8[512]{0}', space=vmem, size = 0x400, scoped, tag = 'output window, operand 0, single buffered']
    #allocation4 [shape = 's32[1]{0}', space=sflag, size = 0x4, scoped, tag = 'scoped memory for tpu_custom_call.1']
    %7 = vsyncpa [#allocation4], 0
    // Predicated region
    $region2: #{tpu_custom_call.1} parent=1 // pred_check
      _
    $region3: #{tpu_custom_call.1} parent=1 // pred_check_branch
      %9 = sbr.rel (0) target = $region5
    $region4: #{tpu_custom_call.1} parent=1 // pred_region
      _
    $region5: #{tpu_custom_call.1} parent=1 // pred_fallthru
      _
    // Predicated region
    $region6: #{tpu_custom_call.1} parent=1 // pred_check
      _
    $region7: #{tpu_custom_call.1} parent=1 // pred_check_branch
      %11 = sbr.rel (0) target = $region9
    $region8: #{tpu_custom_call.1} parent=1 // pred_region
      _
    $region9: #{tpu_custom_call.1} parent=1 // pred_fallthru
      _
    %p12 = scmp.eq.s32.totalorder 0, 0
    // Predicated region
    $region10: #{tpu_custom_call.1} parent=1 // pred_check
      %p13 = pneg %p12
    $region11: #{tpu_custom_call.1} parent=1 // pred_check_branch
      %15 = sbr.rel (%p13) target = $region13
    $region12: #{tpu_custom_call.1} parent=1 // pred_region
      %vm16 = vcmask 130048
      %17 = vst.msk [vmem:[#allocation2] sm:$0xff] %vm16, 0.0
    $region13: #{tpu_custom_call.1} parent=1 // pred_fallthru
      _
    %v18 = vld [vmem:[%s0] sm:$0xff]
    %v19 = vld [vmem:[%s1] sm:$0xff]
    %v20 = vlaneseq
    %v21 = vand.u32 %v20, 127
    %s22 = smul.u32 0, 8
    %v23 = vlaneseq
    %v24 = vshrl.u32 %v23, 7
    %v25 = vstv %s22
    %v26 = vadd.s32 %v25, %v24
    %27 = vset.pattern.permute.xlu0 0
    %28 = vperm.xlu0 %27, %v19
    %v29 = vpop.permute.xlu0 %28
    %vm30 = vcmp.eq.s32.totalorder %v21, %v29
    %vm31 = vcmp.eq.s32.totalorder %v21, 0
    %vm32 = vcmp.eq.s32.totalorder %v19, 0
    %v33 = vsel %vm32, 1, 0
    %34 = vset.pattern.permute.xlu0 0
    %35 = vperm.xlu0 %34, %v33
    %v36 = vpop.permute.xlu0 %35
    %vm37 = vcmp.eq.s32.totalorder %v36, 1
    %vm38 = vmor %vm31, %vm37
    %vm39 = vcmp.ge.s32.totalorder %v26, 8
    %v40 = vsel %vm39, 1, 0
    %vm41 = vcmp.eq.s32.totalorder %v40, 1
    %vm42 = vmor %vm38, %vm41
    %v43 = vsel %vm30, 0.9, 0.007142857
    %v44 = vsel %vm30, -0.105360515, -4.9416423
    %v45 = vsub.f32 %v44, %v18
    %v46 = vmul.f32 %v43, %v45
    %v47 = vsel %vm42, 0.0, %v46
    %v48 = vld [vmem:[#allocation2] sm:$0xff]
    %v49 = vadd.f32 %v48, %v47
    %vm50 = vcmask 130048
    %51 = vst.msk [vmem:[#allocation2] sm:$0xff] %vm50, %v49
    // Predicated region
    $region14: #{tpu_custom_call.1} parent=1 // pred_check
      %p52 = pneg %p12
    $region15: #{tpu_custom_call.1} parent=1 // pred_check_branch
      %54 = sbr.rel (%p52) target = $region17
    $region16: #{tpu_custom_call.1} parent=1 // pred_region
      %v55 = vld [vmem:[#allocation2] sm:$0xff]
      %v56 = vsel %vm50, %v55, 0.0
      %57 = vadd.xlane.f32.xlu0 %v56
      %v58 = vpop.xlane.xlu0 %57
      %v59 = vrot.slane %v58, 4
      %v60 = vadd.f32 %v58, %v59
      %v61 = vrot.slane %v60, 2
      %v62 = vadd.f32 %v60, %v61
      %v63 = vrot.slane %v62, 1
      %v64 = vadd.f32 %v62, %v63
      %s65 = vtos %v64
      %v66 = vstv %s65
      %vm67 = vcmask 0
      %68 = vst.msk [vmem:[#allocation3] sm:$0x1] %vm67, %v66
    $region17: #{tpu_custom_call.1} parent=1 // pred_fallthru
      _
    // Predicated region
    $region18: #{tpu_custom_call.1} parent=1 // pred_check
      _
    $region19: #{tpu_custom_call.1} parent=1 // pred_check_branch
      %70 = sbr.rel (0) target = $region21
    $region20: #{tpu_custom_call.1} parent=1 // pred_region
      %72 = vsyncadd [#allocation4], 0
      %s74 = sshll.u32 [#allocation3], 4
      %s75 = int_to_ptr.vmem [resolvable:$true] %s74
      %s76 = sshll.u32 %s2, 4
      %s77 = int_to_ptr.hbm [resolvable:$true] %s76
      %79 = dma.vmem_to_hbm [thread:$0]  %s75, 16, %s77, [#allocation4]
    $region21: #{tpu_custom_call.1} parent=1 // pred_fallthru
      _
    // Predicated region
    $region22: #{tpu_custom_call.1} parent=1 // pred_check
      _
    $region23: #{tpu_custom_call.1} parent=1 // pred_check_branch
      %81 = sbr.rel (0) target = $region25
    $region24: #{tpu_custom_call.1} parent=1 // pred_region
      %83 = dma.done [#allocation4], 16
    $region25: #{tpu_custom_call.1} parent=1 // pred_fallthru
      _
    %84 = vsyncpa [#allocation4], 1

</llo_original>
